<compile_context>
chip_gen: v5e
topology: v5e:2x2
jax: 0.10.0
libtpu: 0.0.40
codegen_flags: <defaults>
</compile_context>

<pallas_src>
import sys
import functools

import jax
import jax.numpy as jnp
from jax import lax
from jax.experimental import pallas as pl
from jax.experimental.pallas import tpu as pltpu

EPS = sys.float_info.epsilon  # 2.220446049250313e-16, same as the PyTorch script

_LANES = 128
_SUBLANES = 8


def _tpu_config():
    """Per-generation (megacore split, per-step input byte budget, scoped VMEM limit)."""
    kind = ""
    try:
        kind = jax.devices()[0].device_kind.lower()
    except Exception:
        pass
    if "v7" in kind:   # 2 TensorCores/chip, only 64 MiB VMEM per TC -> keep tiles modest
        return 2, 8 * 1024 * 1024, 32 * 1024 * 1024
    if "v6" in kind:   # 1 TensorCore, 128 MiB VMEM -> bigger tiles amortize step overhead
        return 1, 16 * 1024 * 1024, 64 * 1024 * 1024
    if "v5" in kind:   # v5e: 1 TensorCore, DMA-bound; scoped default is only 16 MiB
        return 1, 8 * 1024 * 1024, 48 * 1024 * 1024
    return 1, 8 * 1024 * 1024, 32 * 1024 * 1024   # safe default


def _attn_loss_kernel(*refs, num_head, tile_r, chunk_r, valid_rows, needs_mask, unroll):
    """Accumulate pairwise SSD (via centered identity) over a (tile_r, 128) block."""
    head_refs = refs[:num_head]
    o_ref = refs[num_head]          # (8, 128) partial-sum block, resident across k
    c = pl.program_id(0)            # megacore split axis ("parallel")
    k = pl.program_id(1)            # streaming/reduction axis ("arbitrary")

    @pl.when(k == 0)
    def _():
        o_ref[...] = jnp.zeros_like(o_ref)

    inv_h = jnp.float32(1.0 / num_head)
    h_f = jnp.float32(num_head)
    num_chunks = tile_r // chunk_r

    if needs_mask:
        # Global row index of the first row of this block (unclamped on purpose:
        # duplicated/overflow blocks get a base >= valid_rows and are fully masked).
        block_row0 = (c * pl.num_programs(1) + k) * tile_r
        row_iota = lax.broadcasted_iota(jnp.int32, (chunk_r, 1), 0)

    def body(ci, acc):
        r0 = pl.multiple_of(ci * chunk_r, chunk_r)
        xs = [hr[pl.ds(r0, chunk_r), :].astype(jnp.float32) for hr in head_refs]

        # Per-element mean across heads.
        s = xs[0]
        for x in xs[1:]:
            s = s + x
        m = s * inv_h

        # Centered sums:  sum_{i<j}(x_i-x_j)^2 = H*sum_i d_i^2 - (sum_i d_i)^2,
        # d_i = x_i - m  (numerically stable corrected two-pass form).
        d0 = xs[0] - m
        ssq = d0 * d0
        dsum = d0
        for x in xs[1:]:
            d = x - m
            ssq = ssq + d * d
            dsum = dsum + d
        contrib = h_f * ssq - dsum * dsum

        if needs_mask:
            lim = valid_rows - block_row0 - ci * chunk_r
            contrib = jnp.where(row_iota < lim, contrib, 0.0)

        # Fold (chunk_r, 128) -> (8, 128): pure vreg adds (matches (8,128) tiling).
        folded = jnp.sum(contrib.reshape(chunk_r // _SUBLANES, _SUBLANES, _LANES), axis=0)
        return acc + folded

    acc = lax.fori_loop(0, num_chunks, body,
                        jnp.zeros((_SUBLANES, _LANES), jnp.float32), unroll=unroll)
    o_ref[...] += acc


def attention_loss(heads):
    """heads: list of same-shaped arrays (e.g. NCHW) -> scalar f32 loss."""
    num_head = len(heads)
    if num_head <= 1:
        return jnp.float32(0.0)

    n = int(heads[0].size)
    itemsize = jnp.dtype(heads[0].dtype).itemsize
    split, bytes_budget, vmem_limit = _tpu_config()

    # Lane-dense view: (rows, 128). The reshape is free when n % 128 == 0.
    rows = max(-(-n // _LANES), _SUBLANES)
    pad = rows * _LANES - n   # > 0 only when n is not a lane multiple (or tiny n)

    def _prep(h):
        flat = h.reshape(-1)
        if pad > 0:
            # Rare fallback copy; zero padding contributes 0 to every pairwise SSD.
            flat = jnp.pad(flat, (0, pad))
        return flat.reshape(rows, _LANES)

    xs = [_prep(h) for h in heads]   # original dtype; cast to f32 inside the kernel

    # Inner chunk rows: keep ~<=32 vregs of head data live per chunk.
    chunk_cap = max(_SUBLANES, min(64, (256 // num_head) // _SUBLANES * _SUBLANES))

    # Row tile from the per-step byte budget; multiple of 8; never larger than the
    # array (block <= array dims) or one core's rounded share; multiple of chunk_r.
    core_rows = -(-rows // split)
    core_rows8 = -(-core_rows // _SUBLANES) * _SUBLANES
    rows_floor8 = (rows // _SUBLANES) * _SUBLANES          # rows >= 8 guaranteed
    budget_rows = bytes_budget // (num_head * _LANES * itemsize)
    budget_rows = max(_SUBLANES, (budget_rows // _SUBLANES) * _SUBLANES)
    tile_r = min(budget_rows, core_rows8, rows_floor8)
    chunk_r = min(chunk_cap, tile_r)
    tile_r = (tile_r // chunk_r) * chunk_r

    total_blocks = -(-rows // tile_r)
    steps = -(-total_blocks // split)
    needs_mask = split * steps * tile_r != rows
    last_block = total_blocks - 1
    num_chunks = tile_r // chunk_r
    unroll = num_chunks if num_chunks <= 8 else 4

    # Clamp overflow blocks onto the last valid block (their contribution is masked).
    in_spec = pl.BlockSpec(
        (tile_r, _LANES),
        lambda c, k: (jnp.minimum(c * steps + k, last_block), 0))
    out_spec = pl.BlockSpec((_SUBLANES, _LANES), lambda c, k: (c, 0))

    kernel = functools.partial(
        _attn_loss_kernel, num_head=num_head, tile_r=tile_r, chunk_r=chunk_r,
        valid_rows=rows, needs_mask=needs_mask, unroll=unroll)

    partials = pl.pallas_call(
        kernel,
        out_shape=jax.ShapeDtypeStruct((split * _SUBLANES, _LANES), jnp.float32),
        grid_spec=pltpu.PrefetchScalarGridSpec(
            num_scalar_prefetch=0,
            grid=(split, steps),
            in_specs=[in_spec] * num_head,
            out_specs=out_spec,
        ),
        compiler_params=pltpu.CompilerParams(
            dimension_semantics=("parallel", "arbitrary"),
            vmem_limit_bytes=vmem_limit,
        ),
    )(*xs)

    # Tiny epilogue in plain JAX: one cross-lane reduction + scalar arithmetic.
    cnt = num_head * (num_head - 1) // 2
    loss = jnp.sum(partials) / jnp.float32(n)   # every pair's MSE divides by the same N
    return jnp.float32(cnt) / (loss + jnp.float32(EPS))


def attention_loss_ref(heads):
    """Pure-JAX reference matching the PyTorch forward."""
    num_head = len(heads)
    if num_head <= 1:
        return jnp.float32(0.0)
    loss = jnp.float32(0.0)
    cnt = 0
    for i in range(num_head - 1):
        for j in range(i + 1, num_head):
            loss = loss + jnp.mean(
                (heads[i].astype(jnp.float32) - heads[j].astype(jnp.float32)) ** 2
            )
            cnt += 1
    return jnp.float32(cnt) / (loss + jnp.float32(EPS))


if __name__ == "__main__":
    key = jax.random.PRNGKey(0)
    num_head = 4

    # Primary case (matches the module's typical NCHW attention maps).
    shapes = [
        (2, 4, 16, 16),   # aligned: n = 2048 (multiple of 1024), no masking needed
        (2, 3, 16, 16),   # n = 1536 -> 12 rows: exercises in-kernel edge-row masking
        (3, 1, 7, 9),     # n = 189: exercises the rare pad fallback (n % 128 != 0)
    ]
    ok = True
    for shp in shapes:
        keys = jax.random.split(jax.random.fold_in(key, hash(shp) % 1000), num_head)
        heads = [jax.random.normal(k, shp, dtype=jnp.float32) for k in keys]
        out = jax.block_until_ready(attention_loss(heads))
        ref = jax.block_until_ready(attention_loss_ref(heads))
        ok = ok and bool(jnp.allclose(out, ref, rtol=1e-5, atol=1e-5))
        assert ok, (shp, out, ref)

    print("KERNEL_OK")
</pallas_src>

<mosaic_0001>
module attributes {stable_mosaic.version = 11 : i64} {
  func.func @_attn_loss_kernel(%arg0: i32, %arg1: i32, %arg2: memref<16x128xf32, #tpu.memory_space<vmem>>, %arg3: memref<16x128xf32, #tpu.memory_space<vmem>>, %arg4: memref<16x128xf32, #tpu.memory_space<vmem>>, %arg5: memref<16x128xf32, #tpu.memory_space<vmem>>, %arg6: memref<8x128xf32, #tpu.memory_space<vmem>>) attributes {dimension_semantics = [#tpu.dimension_semantics<parallel>, #tpu.dimension_semantics<arbitrary>], iteration_bounds = array<i64: 1, 1>, scalar_prefetch = 0 : i64, scratch_operands = 0 : i64, tpu.core_type = #tpu.core_type<tc>, window_params = [{transform_indices = @transform_0, window_bounds = array<i64: 16, 128>}, {transform_indices = @transform_1, window_bounds = array<i64: 16, 128>}, {transform_indices = @transform_2, window_bounds = array<i64: 16, 128>}, {transform_indices = @transform_3, window_bounds = array<i64: 16, 128>}, {transform_indices = @transform_4, window_bounds = array<i64: 8, 128>}]} {
    %c0_i32 = arith.constant 0 : i32
    %0 = arith.cmpi eq, %arg1, %c0_i32 : i32
    %1 = arith.extui %0 : i1 to i32
    %c0_i32_0 = arith.constant 0 : i32
    %2 = arith.cmpi ne, %1, %c0_i32_0 : i32
    scf.if %2 {
      %cst_12 = arith.constant 0.000000e+00 : f32
      %43 = vector.broadcast %cst_12 : f32 to vector<8x128xf32>
      %c0_13 = arith.constant 0 : index
      %c0_14 = arith.constant 0 : index
      %44 = vector.load %arg6[%c0_13, %c0_14] : memref<8x128xf32, #tpu.memory_space<vmem>>, vector<8x128xf32>
      tpu.vector_store %arg6[%c0_13, %c0_14], %43 {strides = array<i32>} : memref<8x128xf32, #tpu.memory_space<vmem>>, vector<8x128xf32>,
    } else {
    }
    %cst = arith.constant 0.000000e+00 : f32
    %3 = vector.broadcast %cst : f32 to vector<8x128xf32>
    %cst_1 = arith.constant 2.500000e-01 : f32
    %cst_2 = arith.constant 4.000000e+00 : f32
    %c0_i32_3 = arith.constant 0 : i32
    %c16_i32 = arith.constant 16 : i32
    %4 = arith.muli %c0_i32_3, %c16_i32 : i32
    %5 = tpu.assume_multiple %4, 16 : i32
    %6 = arith.index_cast %5 : i32 to index
    %c0 = arith.constant 0 : index
    %7 = vector.load %arg2[%6, %c0] : memref<16x128xf32, #tpu.memory_space<vmem>>, vector<16x128xf32>
    %8 = arith.index_cast %5 : i32 to index
    %c0_4 = arith.constant 0 : index
    %9 = vector.load %arg3[%8, %c0_4] : memref<16x128xf32, #tpu.memory_space<vmem>>, vector<16x128xf32>
    %10 = arith.index_cast %5 : i32 to index
    %c0_5 = arith.constant 0 : index
    %11 = vector.load %arg4[%10, %c0_5] : memref<16x128xf32, #tpu.memory_space<vmem>>, vector<16x128xf32>
    %12 = arith.index_cast %5 : i32 to index
    %c0_6 = arith.constant 0 : index
    %13 = vector.load %arg5[%12, %c0_6] : memref<16x128xf32, #tpu.memory_space<vmem>>, vector<16x128xf32>
    %14 = arith.addf %7, %9 : vector<16x128xf32>
    %15 = arith.addf %14, %11 : vector<16x128xf32>
    %16 = arith.addf %15, %13 : vector<16x128xf32>
    %17 = vector.broadcast %cst_1 : f32 to vector<16x128xf32>
    %18 = arith.mulf %16, %17 : vector<16x128xf32>
    %19 = arith.subf %7, %18 : vector<16x128xf32>
    %20 = arith.mulf %19, %19 : vector<16x128xf32>
    %21 = arith.subf %9, %18 : vector<16x128xf32>
    %22 = arith.mulf %21, %21 : vector<16x128xf32>
    %23 = arith.addf %20, %22 : vector<16x128xf32>
    %24 = arith.addf %19, %21 : vector<16x128xf32>
    %25 = arith.subf %11, %18 : vector<16x128xf32>
    %26 = arith.mulf %25, %25 : vector<16x128xf32>
    %27 = arith.addf %23, %26 : vector<16x128xf32>
    %28 = arith.addf %24, %25 : vector<16x128xf32>
    %29 = arith.subf %13, %18 : vector<16x128xf32>
    %30 = arith.mulf %29, %29 : vector<16x128xf32>
    %31 = arith.addf %27, %30 : vector<16x128xf32>
    %32 = arith.addf %28, %29 : vector<16x128xf32>
    %33 = vector.broadcast %cst_2 : f32 to vector<16x128xf32>
    %34 = arith.mulf %33, %31 : vector<16x128xf32>
    %35 = arith.mulf %32, %32 : vector<16x128xf32>
    %36 = arith.subf %34, %35 : vector<16x128xf32>
    %37 = vector.shape_cast %36 : vector<16x128xf32> to vector<2x8x128xf32>
    %cst_7 = arith.constant dense<0.000000e+00> : vector<8x128xf32>
    %38 = vector.multi_reduction <add>, %37, %cst_7 [0] : vector<2x8x128xf32> to vector<8x128xf32>
    %39 = arith.addf %3, %38 : vector<8x128xf32>
    %c1_i32 = arith.constant 1 : i32
    %c0_8 = arith.constant 0 : index
    %c0_9 = arith.constant 0 : index
    %40 = vector.load %arg6[%c0_8, %c0_9] : memref<8x128xf32, #tpu.memory_space<vmem>>, vector<8x128xf32>
    %41 = arith.addf %40, %39 : vector<8x128xf32>
    %c0_10 = arith.constant 0 : index
    %c0_11 = arith.constant 0 : index
    %42 = vector.load %arg6[%c0_10, %c0_11] : memref<8x128xf32, #tpu.memory_space<vmem>>, vector<8x128xf32>
    tpu.vector_store %arg6[%c0_10, %c0_11], %41 {strides = array<i32>} : memref<8x128xf32, #tpu.memory_space<vmem>>, vector<8x128xf32>,
    return
  }
  func.func @transform_0(%arg0: i32, %arg1: i32) -> (i32, i32) {
    %c1_i32 = arith.constant 1 : i32
    %0 = arith.muli %arg0, %c1_i32 : i32
    %1 = arith.addi %0, %arg1 : i32
    %c0_i32 = arith.constant 0 : i32
    %2 = arith.minsi %1, %c0_i32 : i32
    %c0_i32_0 = arith.constant 0 : i32
    %c0_i32_1 = arith.constant 0 : i32
    return %2, %c0_i32_0 : i32, i32
  }
  func.func @transform_1(%arg0: i32, %arg1: i32) -> (i32, i32) {
    %c1_i32 = arith.constant 1 : i32
    %0 = arith.muli %arg0, %c1_i32 : i32
    %1 = arith.addi %0, %arg1 : i32
    %c0_i32 = arith.constant 0 : i32
    %2 = arith.minsi %1, %c0_i32 : i32
    %c0_i32_0 = arith.constant 0 : i32
    %c0_i32_1 = arith.constant 0 : i32
    return %2, %c0_i32_0 : i32, i32
  }
  func.func @transform_2(%arg0: i32, %arg1: i32) -> (i32, i32) {
    %c1_i32 = arith.constant 1 : i32
    %0 = arith.muli %arg0, %c1_i32 : i32
    %1 = arith.addi %0, %arg1 : i32
    %c0_i32 = arith.constant 0 : i32
    %2 = arith.minsi %1, %c0_i32 : i32
    %c0_i32_0 = arith.constant 0 : i32
    %c0_i32_1 = arith.constant 0 : i32
    return %2, %c0_i32_0 : i32, i32
  }
  func.func @transform_3(%arg0: i32, %arg1: i32) -> (i32, i32) {
    %c1_i32 = arith.constant 1 : i32
    %0 = arith.muli %arg0, %c1_i32 : i32
    %1 = arith.addi %0, %arg1 : i32
    %c0_i32 = arith.constant 0 : i32
    %2 = arith.minsi %1, %c0_i32 : i32
    %c0_i32_0 = arith.constant 0 : i32
    %c0_i32_1 = arith.constant 0 : i32
    return %2, %c0_i32_0 : i32, i32
  }
  func.func @transform_4(%arg0: i32, %arg1: i32) -> (i32, i32) {
    %c0_i32 = arith.constant 0 : i32
    %c0_i32_0 = arith.constant 0 : i32
    return %arg0, %c0_i32 : i32, i32
  }
}

</mosaic_0001>

<llo_original>
// kernel: tpu_custom_call.1
$region0: #{tpu_custom_call.1}
  #allocation0 [shape = 'u32[]', space=smem, size = 0x4, offset = 0x4, fixed_abs, tag = 'smem constant byte address 0x4 - core index']
  #allocation1 [shape = 'u32[72,128]{1,0:T(1,128)}', space=vmem, size = 0x9000, scoped, tag = 'internal scratch']
  %s0 = inlined_call_operand.hbm [shape: f32[16,128], index: 0, kind: input, shape index: {}]
  %s1 = inlined_call_operand.hbm [shape: f32[16,128], index: 1, kind: input, shape index: {}]
  %s2 = inlined_call_operand.hbm [shape: f32[16,128], index: 2, kind: input, shape index: {}]
  %s3 = inlined_call_operand.hbm [shape: f32[16,128], index: 3, kind: input, shape index: {}]
  %s4 = inlined_call_operand.hbm [shape: f32[8,128], index: 4, kind: output, shape index: {}]
  %s5 = sld [smem:[#allocation0]]
  $region46: #{tpu_custom_call.1} parent=0
    _
  %s7 = ssub.s32 1, %s5
  %s8 = scalar_select 0, %s7, %s5
  $region1: #{tpu_custom_call.1} parent=0
    #allocation2 [shape = 'u8[8192]{0}', space=vmem, size = 0x2000, scoped, tag = 'input window, operand 0, single buffered']
    #allocation3 [shape = 's32[1]{0}', space=sflag, size = 0x4, scoped, tag = 'scoped memory for tpu_custom_call.1']
    #allocation4 [shape = 's32[1]{0}', space=sflag, size = 0x4, scoped, tag = 'scoped memory for tpu_custom_call.1']
    #allocation5 [shape = 'u8[8192]{0}', space=vmem, size = 0x2000, scoped, tag = 'input window, operand 1, single buffered']
    #allocation6 [shape = 's32[1]{0}', space=sflag, size = 0x4, scoped, tag = 'scoped memory for tpu_custom_call.1']
    #allocation7 [shape = 'u8[8192]{0}', space=vmem, size = 0x2000, scoped, tag = 'input window, operand 2, single buffered']
    #allocation8 [shape = 'u8[8192]{0}', space=vmem, size = 0x2000, scoped, tag = 'input window, operand 3, single buffered']
    #allocation9 [shape = 's32[1]{0}', space=sflag, size = 0x4, scoped, tag = 'scoped memory for tpu_custom_call.1']
    #allocation10 [shape = 'u8[4096]{0}', space=vmem, size = 0x1000, scoped, tag = 'output window, operand 0, single buffered']
    %9 = vsyncpa [#allocation3], 0
    %10 = vsyncpa [#allocation6], 0
    %11 = vsyncpa [#allocation9], 0
    %12 = vsyncpa [#allocation4], 0
    // Predicated region
    $region2: #{tpu_custom_call.1} parent=1 // pred_check
      _
    $region3: #{tpu_custom_call.1} parent=1 // pred_check_branch
      %14 = sbr.rel (0) target = $region5
    $region4: #{tpu_custom_call.1} parent=1 // pred_region
      %s15 = sadd.s32 0, 0
      %p16 = scmp.lt.s32.totalorder %s15, 0
      %s17 = scalar_select %p16, %s15, 0
      %s18 = smul.u32 2, %s17
      %20 = vsyncadd [#allocation3], 0
      %s21 = smul.addr %s18, 8
      %s22 = scalar_lea.hbm %s0, %s21
      %s23 = sshll.u32 %s22, 4
      %s24 = int_to_ptr.hbm [resolvable:$true] %s23
      %s25 = sshll.u32 [#allocation2], 4
      %s26 = int_to_ptr.vmem [resolvable:$true] %s25
      %31 = dma.hbm_to_vmem [thread:$0]  %s24, 256, %s26, [#allocation3], 128, 128, 8
    $region5: #{tpu_custom_call.1} parent=1 // pred_fallthru
      _
    // Predicated region
    $region6: #{tpu_custom_call.1} parent=1 // pred_check
      _
    $region7: #{tpu_custom_call.1} parent=1 // pred_check_branch
      %33 = sbr.rel (0) target = $region9
    $region8: #{tpu_custom_call.1} parent=1 // pred_region
      %s34 = sadd.s32 0, 0
      %p35 = scmp.lt.s32.totalorder %s34, 0
      %s36 = scalar_select %p35, %s34, 0
      %s37 = smul.u32 2, %s36
      %39 = vsyncadd [#allocation6], 0
      %s40 = smul.addr %s37, 8
      %s41 = scalar_lea.hbm %s1, %s40
      %s42 = sshll.u32 %s41, 4
      %s43 = int_to_ptr.hbm [resolvable:$true] %s42
      %s44 = sshll.u32 [#allocation5], 4
      %s45 = int_to_ptr.vmem [resolvable:$true] %s44
      %50 = dma.hbm_to_vmem [thread:$0]  %s43, 256, %s45, [#allocation6], 128, 128, 8
    $region9: #{tpu_custom_call.1} parent=1 // pred_fallthru
      _
    // Predicated region
    $region10: #{tpu_custom_call.1} parent=1 // pred_check
      _
    $region11: #{tpu_custom_call.1} parent=1 // pred_check_branch
      %52 = sbr.rel (0) target = $region13
    $region12: #{tpu_custom_call.1} parent=1 // pred_region
      %s53 = sadd.s32 0, 0
      %p54 = scmp.lt.s32.totalorder %s53, 0
      %s55 = scalar_select %p54, %s53, 0
      %s56 = smul.u32 2, %s55
      %58 = vsyncadd [#allocation6], 0
      %s59 = smul.addr %s56, 8
      %s60 = scalar_lea.hbm %s2, %s59
      %s61 = sshll.u32 %s60, 4
      %s62 = int_to_ptr.hbm [resolvable:$true] %s61
      %s63 = sshll.u32 [#allocation7], 4
      %s64 = int_to_ptr.vmem [resolvable:$true] %s63
      %69 = dma.hbm_to_vmem [thread:$0]  %s62, 256, %s64, [#allocation6], 128, 128, 8
    $region13: #{tpu_custom_call.1} parent=1 // pred_fallthru
      _
    // Predicated region
    $region14: #{tpu_custom_call.1} parent=1 // pred_check
      _
    $region15: #{tpu_custom_call.1} parent=1 // pred_check_branch
      %71 = sbr.rel (0) target = $region17
    $region16: #{tpu_custom_call.1} parent=1 // pred_region
      %s72 = sadd.s32 0, 0
      %p73 = scmp.lt.s32.totalorder %s72, 0
      %s74 = scalar_select %p73, %s72, 0
      %s75 = smul.u32 2, %s74
      %77 = vsyncadd [#allocation9], 0
      %s78 = smul.addr %s75, 8
      %s79 = scalar_lea.hbm %s3, %s78
      %s80 = sshll.u32 %s79, 4
      %s81 = int_to_ptr.hbm [resolvable:$true] %s80
      %s82 = sshll.u32 [#allocation8], 4
      %s83 = int_to_ptr.vmem [resolvable:$true] %s82
      %88 = dma.hbm_to_vmem [thread:$0]  %s81, 256, %s83, [#allocation9], 128, 128, 8
    $region17: #{tpu_custom_call.1} parent=1 // pred_fallthru
      _
    // Predicated region
    $region18: #{tpu_custom_call.1} parent=1 // pred_check
      _
    $region19: #{tpu_custom_call.1} parent=1 // pred_check_branch
      %90 = sbr.rel (0) target = $region21
    $region20: #{tpu_custom_call.1} parent=1 // pred_region
      %92 = dma.done [#allocation3], 256
    $region21: #{tpu_custom_call.1} parent=1 // pred_fallthru
      _
    // Predicated region
    $region22: #{tpu_custom_call.1} parent=1 // pred_check
      _
    $region23: #{tpu_custom_call.1} parent=1 // pred_check_branch
      %94 = sbr.rel (0) target = $region25
    $region24: #{tpu_custom_call.1} parent=1 // pred_region
      %96 = dma.done [#allocation6], 256
    $region25: #{tpu_custom_call.1} parent=1 // pred_fallthru
      _
    // Predicated region
    $region26: #{tpu_custom_call.1} parent=1 // pred_check
      _
    $region27: #{tpu_custom_call.1} parent=1 // pred_check_branch
      %98 = sbr.rel (0) target = $region29
    $region28: #{tpu_custom_call.1} parent=1 // pred_region
      %100 = dma.done [#allocation6], 256
    $region29: #{tpu_custom_call.1} parent=1 // pred_fallthru
      _
    // Predicated region
    $region30: #{tpu_custom_call.1} parent=1 // pred_check
      _
    $region31: #{tpu_custom_call.1} parent=1 // pred_check_branch
      %102 = sbr.rel (0) target = $region33
    $region32: #{tpu_custom_call.1} parent=1 // pred_region
      %104 = dma.done [#allocation9], 256
    $region33: #{tpu_custom_call.1} parent=1 // pred_fallthru
      _
    %s105 = sadd.s32 0, 0
    %p106 = scmp.lt.s32.totalorder %s105, 0
    %s107 = scalar_select %p106, %s105, 0
    %s108 = smul.u32 2, %s107
    %s109 = sadd.s32 0, 0
    %p110 = scmp.lt.s32.totalorder %s109, 0
    %s111 = scalar_select %p110, %s109, 0
    %s112 = smul.u32 2, %s111
    %s113 = sadd.s32 0, 0
    %p114 = scmp.lt.s32.totalorder %s113, 0
    %s115 = scalar_select %p114, %s113, 0
    %s116 = smul.u32 2, %s115
    %s117 = sadd.s32 0, 0
    %p118 = scmp.lt.s32.totalorder %s117, 0
    %s119 = scalar_select %p118, %s117, 0
    %s120 = smul.u32 2, %s119
    %p121 = scmp.eq.s32.totalorder 0, 0
    // Predicated region
    $region34: #{tpu_custom_call.1} parent=1 // pred_check
      %p122 = pneg %p121
    $region35: #{tpu_custom_call.1} parent=1 // pred_check_branch
      %124 = sbr.rel (%p122) target = $region37
    $region36: #{tpu_custom_call.1} parent=1 // pred_region
      %125 = vst [vmem:[#allocation10] sm:$0xff] 0.0
    $region37: #{tpu_custom_call.1} parent=1 // pred_fallthru
      _
    %v126 = vld [vmem:[#allocation2] sm:$0xff]
    %v127 = vld [vmem:[#allocation2 + $0x8] sm:$0xff]
    %v128 = vld [vmem:[#allocation5] sm:$0xff]
    %v129 = vld [vmem:[#allocation5 + $0x8] sm:$0xff]
    %v130 = vld [vmem:[#allocation7] sm:$0xff]
    %v131 = vld [vmem:[#allocation7 + $0x8] sm:$0xff]
    %v132 = vld [vmem:[#allocation8] sm:$0xff]
    %v133 = vld [vmem:[#allocation8 + $0x8] sm:$0xff]
    %v134 = vadd.f32 %v126, %v128
    %v135 = vadd.f32 %v127, %v129
    %v136 = vadd.f32 %v134, %v130
    %v137 = vadd.f32 %v135, %v131
    %v138 = vadd.f32 %v136, %v132
    %v139 = vadd.f32 %v137, %v133
    %v140 = vmul.f32 %v138, 0.25
    %v141 = vmul.f32 %v139, 0.25
    %v142 = vsub.f32 %v126, %v140
    %v143 = vsub.f32 %v127, %v141
    %v144 = vmul.f32 %v142, %v142
    %v145 = vmul.f32 %v143, %v143
    %v146 = vsub.f32 %v128, %v140
    %v147 = vsub.f32 %v129, %v141
    %v148 = vmul.f32 %v146, %v146
    %v149 = vmul.f32 %v147, %v147
    %v150 = vadd.f32 %v144, %v148
    %v151 = vadd.f32 %v145, %v149
    %v152 = vadd.f32 %v142, %v146
    %v153 = vadd.f32 %v143, %v147
    %v154 = vsub.f32 %v130, %v140
    %v155 = vsub.f32 %v131, %v141
    %v156 = vmul.f32 %v154, %v154
    %v157 = vmul.f32 %v155, %v155
    %v158 = vadd.f32 %v150, %v156
    %v159 = vadd.f32 %v151, %v157
    %v160 = vadd.f32 %v152, %v154
    %v161 = vadd.f32 %v153, %v155
    %v162 = vsub.f32 %v132, %v140
    %v163 = vsub.f32 %v133, %v141
    %v164 = vmul.f32 %v162, %v162
    %v165 = vmul.f32 %v163, %v163
    %v166 = vadd.f32 %v158, %v164
    %v167 = vadd.f32 %v159, %v165
    %v168 = vadd.f32 %v160, %v162
    %v169 = vadd.f32 %v161, %v163
    %v170 = vmul.f32 %v166, 4.0
    %v171 = vmul.f32 %v167, 4.0
    %v172 = vmul.f32 %v168, %v168
    %v173 = vmul.f32 %v169, %v169
    %v174 = vsub.f32 %v170, %v172
    %v175 = vsub.f32 %v171, %v173
    %v176 = vadd.f32 %v174, %v175
    %v177 = vadd.f32 %v176, 0.0
    %v178 = vld [vmem:[#allocation10] sm:$0xff]
    %v179 = vadd.f32 %v178, %v177
    %180 = vst [vmem:[#allocation10] sm:$0xff] %v179
    // Predicated region
    $region38: #{tpu_custom_call.1} parent=1 // pred_check
      _
    $region39: #{tpu_custom_call.1} parent=1 // pred_check_branch
      %182 = sbr.rel (0) target = $region41
    $region40: #{tpu_custom_call.1} parent=1 // pred_region
      %184 = vsyncadd [#allocation4], 0
      %s186 = sshll.u32 [#allocation10], 4
      %s187 = int_to_ptr.vmem [resolvable:$true] %s186
      %s188 = sshll.u32 %s4, 4
      %s189 = int_to_ptr.hbm [resolvable:$true] %s188
      %191 = dma.vmem_to_hbm [thread:$0]  %s187, 128, %s189, [#allocation4]
    $region41: #{tpu_custom_call.1} parent=1 // pred_fallthru
      _
    // Predicated region
    $region42: #{tpu_custom_call.1} parent=1 // pred_check
      _
    $region43: #{tpu_custom_call.1} parent=1 // pred_check_branch
      %193 = sbr.rel (0) target = $region45
    $region44: #{tpu_custom_call.1} parent=1 // pred_region
      %195 = dma.done [#allocation4], 128
    $region45: #{tpu_custom_call.1} parent=1 // pred_fallthru
      _
    %196 = vsyncpa [#allocation3], 1
    %197 = vsyncpa [#allocation6], 1
    %198 = vsyncpa [#allocation9], 1
    %199 = vsyncpa [#allocation4], 1

</llo_original>
